<compile_context>
chip_gen: v5e
topology: v5e:2x2
jax: 0.10.0
libtpu: 0.0.40
codegen_flags: <defaults>
</compile_context>

<pallas_src>
import functools

import jax
import jax.numpy as jnp
from jax import lax
from jax.experimental import pallas as pl
from jax.experimental.pallas import tpu as pltpu


def _round_up(x, m):
    return ((x + m - 1) // m) * m


def _pick_b_block(bp, cap=256):
    """Rows per batch block (always a multiple of 8 that divides bp).

    Fill the MXU M dimension; when the batch is large enough split it into
    (at least) two blocks so the leading 'parallel' grid axis can feed both
    v7x TensorCores.  For the toy demo (bp == 8) this is a single block."""
    if bp <= 8:
        return bp
    if bp <= cap:
        half = bp // 2
        return half if half % 8 == 0 else bp
    b = cap
    while b >= 8:
        if bp % b == 0:
            return b
        b -= 8
    return 8


def _pick_t_block(s_pad, b_blk, hp, itemsize, vmem_budget=32 << 20, cap=32):
    """Largest multiple-of-8 divisor of s_pad that fits the VMEM budget and the
    static-unroll cap (cap bounds the fully-unrolled inner loop)."""
    fixed = hp * hp * itemsize + 3 * 4 * b_blk * hp        # weight + carry + hlast
    per_t = 4 * b_blk * hp * itemsize                      # 2 in + 2 out bufs / step
    from_vmem = max(8, (vmem_budget - fixed) // max(per_t, 1))
    cap = int(min(cap, from_vmem))
    best = 8
    d = 8
    while d <= min(cap, s_pad):
        if s_pad % d == 0:
            best = d
        d += 8
    return best


def rnn_kernel(xp_ref, whh_hbm, out_ref, hlast_ref,
               h_scratch, whh_vmem, whh_sem, *, t_block, last_t_blk, last_i):
    """One grid step = t_block time steps of  h <- tanh(x_proj_t + h @ W_hh^T).

    xp_ref   : (B_BLK, T_BLOCK, Hp) hoisted input projection (+ fused biases)
    whh_hbm  : (Hp, Hp)             W_hh^T, left in HBM (memory_space=pl.ANY)
    out_ref  : (B_BLK, T_BLOCK, Hp) per-step hidden states, batch-major
    hlast_ref: (B_BLK, Hp)          hidden state of the last REAL time step
    h_scratch: (B_BLK, Hp) f32      recurrent carry, persists across time blocks
    whh_vmem : (Hp, Hp)             single-buffered VMEM copy of W_hh^T
    """
    t_idx = pl.program_id(1)

    @pl.when(t_idx == 0)
    def _():
        # Fresh carry for this batch block + a single DMA of the invariant
        # recurrent weight (re-done per batch block -> megacore-safe).
        h_scratch[...] = jnp.zeros_like(h_scratch)
        cp = pltpu.make_async_copy(whh_hbm, whh_vmem, whh_sem)
        cp.start()
        cp.wait()

    whh = whh_vmem[...]
    h = h_scratch[...]                                    # f32 carry

    # Fully unrolled static time loop; T_BLOCK is capped (<= 32) by the
    # wrapper so code size / vreg pressure stay bounded.  The recurrence is
    # strictly serial, so a traced loop would buy no extra ILP anyway.
    for i in range(t_block):
        acc = jnp.dot(h.astype(whh.dtype), whh,           # bf16 only feeds the MXU
                      preferred_element_type=jnp.float32)
        h = jnp.tanh(xp_ref[:, i, :].astype(jnp.float32) + acc)
        out_ref[:, i, :] = h.astype(out_ref.dtype)        # lane-dense store
        if i == last_i:
            h_cap = h
            @pl.when(t_idx == last_t_blk)
            def _():
                hlast_ref[...] = h_cap.astype(hlast_ref.dtype)

    h_scratch[...] = h


def head_kernel(h_ref, w1_ref, b1_ref, w2_ref, b2_ref, out_ref):
    """linear1 -> ReLU -> linear2 -> tanh on the final hidden state."""
    z1 = jnp.dot(h_ref[...], w1_ref[...], preferred_element_type=jnp.float32) + b1_ref[...]
    z1 = jnp.maximum(z1, 0.0)
    z2 = jnp.dot(z1, w2_ref[...], preferred_element_type=jnp.float32) + b2_ref[...]
    out_ref[...] = jnp.tanh(z2).astype(out_ref.dtype)


def encoder_forward(tokens, params, storage_dtype=jnp.float32):
    """tokens: (B, S) int32.
    Returns (output (B, S, H_enc) f32, hidden (1, B, H_dec) f32) like the
    PyTorch module (eval mode).  storage_dtype controls the precision of the
    HBM-resident activations / recurrent weight (pass jnp.bfloat16 on v6e/v7x
    to halve HBM + VMEM traffic; all compute stays in f32)."""
    emb_table = params["embedding"]                 # (V, E)
    W_ih = params["W_ih"]                           # (H_enc, E)   PyTorch layout
    W_hh = params["W_hh"]                           # (H_enc, H_enc)
    b_ih = params["b_ih"]                           # (H_enc,)
    b_hh = params["b_hh"]                           # (H_enc,)
    W1, b1 = params["W1"], params["b1"]             # (H_enc, H_enc), (H_enc,)
    W2, b2 = params["W2"], params["b2"]             # (H_dec, H_enc), (H_dec,)

    B, S = tokens.shape
    E = emb_table.shape[1]
    H = W_ih.shape[0]
    Hd = W2.shape[0]

    itemsize = jnp.dtype(storage_dtype).itemsize
    Bp = _round_up(B, 8)                       # sublane-aligned batch
    Hp = _round_up(H, 128)                     # lane-aligned hidden sizes
    Hdp = _round_up(Hd, 128)
    S_pad = _round_up(S, 8)                    # avoid the T_BLOCK=1 cliff
    B_BLK = _pick_b_block(Bp)
    T_BLOCK = _pick_t_block(S_pad, B_BLK, Hp, itemsize)
    num_b_blocks = Bp // B_BLK
    num_t_blocks = S_pad // T_BLOCK
    last_t_blk = (S - 1) // T_BLOCK            # where the last REAL step lives
    last_i = (S - 1) % T_BLOCK

    # --- plain-JAX glue: embedding gather + (eval-mode) dropout --------------
    emb = jnp.take(emb_table, tokens, axis=0).astype(jnp.float32)      # (B, S, E)

    # --- hoisted input projection: ONE flat matmul, produced batch-major -----
    # x_proj[b, s, :] = emb[b, s, :] @ W_ih^T + (b_ih + b_hh); padded lanes = 0.
    w_ih_t = jnp.zeros((E, Hp), jnp.float32).at[:, :H].set(W_ih.T)
    bias = jnp.zeros((Hp,), jnp.float32).at[:H].set(b_ih + b_hh)
    x_proj = (emb.reshape(B * S, E) @ w_ih_t + bias).reshape(B, S, Hp)
    x_proj = jnp.pad(x_proj, ((0, Bp - B), (0, S_pad - S), (0, 0)))
    x_proj = x_proj.astype(storage_dtype)                              # (Bp, S_pad, Hp)

    # Zero-padded W_hh^T: padded hidden lanes stay exactly 0 through tanh.
    whh_t = jnp.zeros((Hp, Hp), storage_dtype).at[:H, :H].set(W_hh.T.astype(storage_dtype))

    # VMEM budget for the recurrence: 2 in + 2 out pipeline buffers,
    # single-buffered weight scratch, f32 carry, hlast buffers, margin.
    act_block = B_BLK * T_BLOCK * Hp * itemsize
    rnn_vmem = 4 * act_block + Hp * Hp * itemsize + 3 * 4 * B_BLK * Hp + (4 << 20)
    rnn_vmem = int(min(max(rnn_vmem, 16 << 20), 64 << 20))

    out_bm, h_last = pl.pallas_call(
        functools.partial(rnn_kernel, t_block=T_BLOCK,
                          last_t_blk=last_t_blk, last_i=last_i),
        out_shape=(
            jax.ShapeDtypeStruct((Bp, S_pad, Hp), storage_dtype),   # all hidden states
            jax.ShapeDtypeStruct((Bp, Hp), jnp.float32),            # last hidden state
        ),
        grid_spec=pltpu.PrefetchScalarGridSpec(
            num_scalar_prefetch=0,
            grid=(num_b_blocks, num_t_blocks),
            in_specs=[
                # batch-major projection, consumed in the order it was produced
                pl.BlockSpec((B_BLK, T_BLOCK, Hp), lambda b, t: (b, t, 0)),
                # invariant recurrent weight: stays in HBM, DMA'd once per
                # batch block into a single VMEM scratch (no double buffering)
                pl.BlockSpec(memory_space=pl.ANY),
            ],
            out_specs=[
                pl.BlockSpec((B_BLK, T_BLOCK, Hp), lambda b, t: (b, t, 0)),
                pl.BlockSpec((B_BLK, Hp), lambda b, t: (b, 0)),
            ],
            scratch_shapes=[
                pltpu.VMEM((B_BLK, Hp), jnp.float32),     # recurrent carry (f32)
                pltpu.VMEM((Hp, Hp), storage_dtype),      # single-buffered W_hh^T
                pltpu.SemaphoreType.DMA(()),              # its DMA semaphore
            ],
        ),
        compiler_params=pltpu.CompilerParams(
            # batch blocks are independent (v7x megacore); time is sequential.
            dimension_semantics=("parallel", "arbitrary"),
            vmem_limit_bytes=rnn_vmem),
    )(x_proj, whh_t)

    # --- linear1 -> ReLU -> linear2 -> tanh head on the last hidden state ----
    w1_t = jnp.zeros((Hp, Hp), jnp.float32).at[:H, :H].set(W1.T)
    b1_p = jnp.zeros((1, Hp), jnp.float32).at[0, :H].set(b1)
    w2_t = jnp.zeros((Hp, Hdp), jnp.float32).at[:H, :Hd].set(W2.T)
    b2_p = jnp.zeros((1, Hdp), jnp.float32).at[0, :Hd].set(b2)

    head_bytes = 4 * (Bp * Hp + Hp * Hp + Hp + Hp * Hdp + Hdp + Bp * Hdp) + (2 << 20)
    head_vmem = int(min(max(head_bytes, 8 << 20), 64 << 20))

    hidden_p = pl.pallas_call(
        head_kernel,
        out_shape=jax.ShapeDtypeStruct((Bp, Hdp), jnp.float32),
        in_specs=[pl.BlockSpec(memory_space=pltpu.MemorySpace.VMEM)] * 5,
        out_specs=pl.BlockSpec(memory_space=pltpu.MemorySpace.VMEM),
        compiler_params=pltpu.CompilerParams(vmem_limit_bytes=head_vmem),
    )(h_last, w1_t, b1_p, w2_t, b2_p)

    # No transpose needed: output is already batch-major; just strip padding.
    output = out_bm[:B, :S, :H].astype(jnp.float32)                    # (B, S, H_enc)
    hidden = hidden_p[:B, :Hd][None, :, :]                             # (1, B, H_dec)
    return output, hidden


def reference_forward(tokens, params):
    """Pure-JAX reference (eval-mode) for verification."""
    emb = jnp.take(params["embedding"], tokens, axis=0)   # (B, S, E)
    B, S, E = emb.shape
    H = params["W_ih"].shape[0]

    def step(h, x_t):
        h_new = jnp.tanh(x_t @ params["W_ih"].T + params["b_ih"]
                         + h @ params["W_hh"].T + params["b_hh"])
        return h_new, h_new

    h0 = jnp.zeros((B, H), jnp.float32)
    h_last, outs = lax.scan(step, h0, jnp.transpose(emb, (1, 0, 2)))
    output = jnp.transpose(outs, (1, 0, 2))
    hid = jnp.maximum(h_last @ params["W1"].T + params["b1"], 0.0)
    hid = jnp.tanh(hid @ params["W2"].T + params["b2"])
    return output, hid[None, :, :]


def make_params(key, vocab, emb, h_enc, h_dec):
    ks = jax.random.split(key, 9)
    def u(k, shape, scale=0.1):
        return jax.random.uniform(k, shape, jnp.float32, -scale, scale)
    return {
        "embedding": u(ks[0], (vocab, emb), 1.0),
        "W_ih": u(ks[1], (h_enc, emb)),
        "W_hh": u(ks[2], (h_enc, h_enc)),
        "b_ih": u(ks[3], (h_enc,)),
        "b_hh": u(ks[4], (h_enc,)),
        "W1":   u(ks[5], (h_enc, h_enc)),
        "b1":   u(ks[6], (h_enc,)),
        "W2":   u(ks[7], (h_dec, h_enc)),
        "b2":   u(ks[8], (h_dec,)),
    }


if __name__ == "__main__":
    B, S = 2, 8
    VOCAB, EMB, H_ENC, H_DEC = 20, 32, 32, 32

    key = jax.random.PRNGKey(0)
    k_tok, k_par = jax.random.split(key)
    tokens = jax.random.randint(k_tok, (B, S), 0, VOCAB, dtype=jnp.int32)
    params = make_params(k_par, VOCAB, EMB, H_ENC, H_DEC)

    fwd = jax.jit(encoder_forward, static_argnames=("storage_dtype",))

    # f32 storage (default): exact parity with the pure-JAX reference.
    output, hidden = fwd(tokens, params)
    jax.block_until_ready((output, hidden))

    ref_out, ref_hid = reference_forward(tokens, params)
    assert output.shape == (B, S, H_ENC)
    assert hidden.shape == (1, B, H_DEC)
    assert jnp.allclose(output, ref_out, atol=1e-5, rtol=1e-5)
    assert jnp.allclose(hidden, ref_hid, atol=1e-5, rtol=1e-5)

    # bf16 storage for the HBM-resident activations / recurrent weight
    # (v6e/v7x traffic optimization); compute stays f32 -> only small drift.
    out_bf, hid_bf = fwd(tokens, params, storage_dtype=jnp.bfloat16)
    jax.block_until_ready((out_bf, hid_bf))
    assert float(jnp.max(jnp.abs(out_bf - ref_out))) < 0.1
    assert float(jnp.max(jnp.abs(hid_bf - ref_hid))) < 0.1

    print("KERNEL_OK")
</pallas_src>

<mosaic_0001>
module attributes {stable_mosaic.version = 11 : i64} {
  func.func @head_kernel(%arg0: memref<8x128xf32, #tpu.memory_space<vmem>>, %arg1: memref<128x128xf32, #tpu.memory_space<vmem>>, %arg2: memref<1x128xf32, #tpu.memory_space<vmem>>, %arg3: memref<128x128xf32, #tpu.memory_space<vmem>>, %arg4: memref<1x128xf32, #tpu.memory_space<vmem>>, %arg5: memref<8x128xf32, #tpu.memory_space<vmem>>) attributes {dimension_semantics = [], scalar_prefetch = 0 : i64, scratch_operands = 0 : i64, tpu.core_type = #tpu.core_type<tc>} {
    %c0 = arith.constant 0 : index
    %c0_0 = arith.constant 0 : index
    %0 = vector.load %arg0[%c0, %c0_0] : memref<8x128xf32, #tpu.memory_space<vmem>>, vector<8x128xf32>
    %c0_1 = arith.constant 0 : index
    %c0_2 = arith.constant 0 : index
    %1 = vector.load %arg1[%c0_1, %c0_2] : memref<128x128xf32, #tpu.memory_space<vmem>>, vector<128x128xf32>
    %cst = arith.constant dense<0.000000e+00> : vector<8x128xf32>
    %2 = tpu.matmul %0, %1, %cst {dimension_numbers = #tpu.dot_dimension_numbers<[1], [0], [0], [1], [0, 0, 1, 1], [], []>} : vector<8x128xf32>, vector<128x128xf32>, vector<8x128xf32> -> vector<8x128xf32>
    %c0_3 = arith.constant 0 : index
    %c0_4 = arith.constant 0 : index
    %3 = vector.load %arg2[%c0_3, %c0_4] : memref<1x128xf32, #tpu.memory_space<vmem>>, vector<1x128xf32>
    %4 = vector.broadcast %3 : vector<1x128xf32> to vector<8x128xf32>
    %5 = arith.addf %2, %4 : vector<8x128xf32>
    %cst_5 = arith.constant 0.000000e+00 : f32
    %6 = vector.broadcast %cst_5 : f32 to vector<8x128xf32>
    %7 = arith.maximumf %5, %6 : vector<8x128xf32>
    %c0_6 = arith.constant 0 : index
    %c0_7 = arith.constant 0 : index
    %8 = vector.load %arg3[%c0_6, %c0_7] : memref<128x128xf32, #tpu.memory_space<vmem>>, vector<128x128xf32>
    %cst_8 = arith.constant dense<0.000000e+00> : vector<8x128xf32>
    %9 = tpu.matmul %7, %8, %cst_8 {dimension_numbers = #tpu.dot_dimension_numbers<[1], [0], [0], [1], [0, 0, 1, 1], [], []>} : vector<8x128xf32>, vector<128x128xf32>, vector<8x128xf32> -> vector<8x128xf32>
    %c0_9 = arith.constant 0 : index
    %c0_10 = arith.constant 0 : index
    %10 = vector.load %arg4[%c0_9, %c0_10] : memref<1x128xf32, #tpu.memory_space<vmem>>, vector<1x128xf32>
    %11 = vector.broadcast %10 : vector<1x128xf32> to vector<8x128xf32>
    %12 = arith.addf %9, %11 : vector<8x128xf32>
    %13 = math.tanh %12 : vector<8x128xf32>
    %c0_11 = arith.constant 0 : index
    %c0_12 = arith.constant 0 : index
    %14 = vector.load %arg5[%c0_11, %c0_12] : memref<8x128xf32, #tpu.memory_space<vmem>>, vector<8x128xf32>
    tpu.vector_store %arg5[%c0_11, %c0_12], %13 {strides = array<i32>} : memref<8x128xf32, #tpu.memory_space<vmem>>, vector<8x128xf32>,
    return
  }
}

module attributes {stable_mosaic.version = 11 : i64} {
  func.func @rnn_kernel(%arg0: i32, %arg1: i32, %arg2: memref<8x8x128xf32, #tpu.memory_space<vmem>>, %arg3: memref<128x128xf32, #tpu.memory_space<any>>, %arg4: memref<8x8x128xf32, #tpu.memory_space<vmem>>, %arg5: memref<8x128xf32, #tpu.memory_space<vmem>>, %arg6: memref<8x128xf32, #tpu.memory_space<vmem>>, %arg7: memref<128x128xf32, #tpu.memory_space<vmem>>, %arg8: memref<!tpu.dma_semaphore, #tpu.memory_space<semaphore_mem>>) attributes {dimension_semantics = [#tpu.dimension_semantics<parallel>, #tpu.dimension_semantics<arbitrary>], iteration_bounds = array<i64: 1, 1>, scalar_prefetch = 0 : i64, scratch_operands = 3 : i64, tpu.core_type = #tpu.core_type<tc>, window_params = [{transform_indices = @transform_0, window_bounds = array<i64: 8, 8, 128>}, {}, {transform_indices = @transform_2, window_bounds = array<i64: 8, 8, 128>}, {transform_indices = @transform_3, window_bounds = array<i64: 8, 128>}]} {
    %c0_i32 = arith.constant 0 : i32
    %0 = arith.cmpi eq, %arg1, %c0_i32 : i32
    %1 = arith.extui %0 : i1 to i32
    %c0_i32_0 = arith.constant 0 : i32
    %2 = arith.cmpi ne, %1, %c0_i32_0 : i32
    scf.if %2 {
      %cst_56 = arith.constant 0.000000e+00 : f32
      %73 = vector.broadcast %cst_56 : f32 to vector<8x128xf32>
      %c0_57 = arith.constant 0 : index
      %c0_58 = arith.constant 0 : index
      %74 = vector.load %arg6[%c0_57, %c0_58] : memref<8x128xf32, #tpu.memory_space<vmem>>, vector<8x128xf32>
      tpu.vector_store %arg6[%c0_57, %c0_58], %73 {strides = array<i32>} : memref<8x128xf32, #tpu.memory_space<vmem>>, vector<8x128xf32>,
      tpu.enqueue_dma source(%arg3 : memref<128x128xf32, #tpu.memory_space<any>>) target(%arg7 : memref<128x128xf32, #tpu.memory_space<vmem>>) target_semaphore(%arg8 : memref<!tpu.dma_semaphore, #tpu.memory_space<semaphore_mem>>)
      tpu.wait_dma2 semaphore(%arg8 : memref<!tpu.dma_semaphore, #tpu.memory_space<semaphore_mem>>) src(%arg3 : memref<128x128xf32, #tpu.memory_space<any>>) dst(%arg7 : memref<128x128xf32, #tpu.memory_space<vmem>>)
    } else {
    }
    %c0 = arith.constant 0 : index
    %c0_1 = arith.constant 0 : index
    %3 = vector.load %arg7[%c0, %c0_1] : memref<128x128xf32, #tpu.memory_space<vmem>>, vector<128x128xf32>
    %c0_2 = arith.constant 0 : index
    %c0_3 = arith.constant 0 : index
    %4 = vector.load %arg6[%c0_2, %c0_3] : memref<8x128xf32, #tpu.memory_space<vmem>>, vector<8x128xf32>
    %cst = arith.constant dense<0.000000e+00> : vector<8x128xf32>
    %5 = tpu.matmul %4, %3, %cst {dimension_numbers = #tpu.dot_dimension_numbers<[1], [0], [0], [1], [0, 0, 1, 1], [], []>} : vector<8x128xf32>, vector<128x128xf32>, vector<8x128xf32> -> vector<8x128xf32>
    %c0_4 = arith.constant 0 : index
    %c0_5 = arith.constant 0 : index
    %c0_6 = arith.constant 0 : index
    %6 = vector.load %arg2[%c0_4, %c0_5, %c0_6] : memref<8x8x128xf32, #tpu.memory_space<vmem>>, vector<8x1x128xf32>
    %7 = vector.shape_cast %6 : vector<8x1x128xf32> to vector<8x128xf32>
    %8 = arith.addf %7, %5 : vector<8x128xf32>
    %9 = math.tanh %8 : vector<8x128xf32>
    %c0_7 = arith.constant 0 : index
    %c0_8 = arith.constant 0 : index
    %c0_9 = arith.constant 0 : index
    %10 = vector.load %arg4[%c0_7, %c0_8, %c0_9] : memref<8x8x128xf32, #tpu.memory_space<vmem>>, vector<8x1x128xf32>
    %11 = vector.shape_cast %10 : vector<8x1x128xf32> to vector<8x128xf32>
    %12 = vector.shape_cast %9 : vector<8x128xf32> to vector<8x1x128xf32>
    tpu.vector_store %arg4[%c0_7, %c0_8, %c0_9], %12 {strides = array<i32>} : memref<8x8x128xf32, #tpu.memory_space<vmem>>, vector<8x1x128xf32>,
    %cst_10 = arith.constant dense<0.000000e+00> : vector<8x128xf32>
    %13 = tpu.matmul %9, %3, %cst_10 {dimension_numbers = #tpu.dot_dimension_numbers<[1], [0], [0], [1], [0, 0, 1, 1], [], []>} : vector<8x128xf32>, vector<128x128xf32>, vector<8x128xf32> -> vector<8x128xf32>
    %c0_11 = arith.constant 0 : index
    %c1 = arith.constant 1 : index
    %c0_12 = arith.constant 0 : index
    %14 = vector.load %arg2[%c0_11, %c1, %c0_12] : memref<8x8x128xf32, #tpu.memory_space<vmem>>, vector<8x1x128xf32>
    %15 = vector.shape_cast %14 : vector<8x1x128xf32> to vector<8x128xf32>
    %16 = arith.addf %15, %13 : vector<8x128xf32>
    %17 = math.tanh %16 : vector<8x128xf32>
    %c0_13 = arith.constant 0 : index
    %c1_14 = arith.constant 1 : index
    %c0_15 = arith.constant 0 : index
    %18 = vector.load %arg4[%c0_13, %c1_14, %c0_15] : memref<8x8x128xf32, #tpu.memory_space<vmem>>, vector<8x1x128xf32>
    %19 = vector.shape_cast %18 : vector<8x1x128xf32> to vector<8x128xf32>
    %20 = vector.shape_cast %17 : vector<8x128xf32> to vector<8x1x128xf32>
    tpu.vector_store %arg4[%c0_13, %c1_14, %c0_15], %20 {strides = array<i32>} : memref<8x8x128xf32, #tpu.memory_space<vmem>>, vector<8x1x128xf32>,
    %cst_16 = arith.constant dense<0.000000e+00> : vector<8x128xf32>
    %21 = tpu.matmul %17, %3, %cst_16 {dimension_numbers = #tpu.dot_dimension_numbers<[1], [0], [0], [1], [0, 0, 1, 1], [], []>} : vector<8x128xf32>, vector<128x128xf32>, vector<8x128xf32> -> vector<8x128xf32>
    %c0_17 = arith.constant 0 : index
    %c2 = arith.constant 2 : index
    %c0_18 = arith.constant 0 : index
    %22 = vector.load %arg2[%c0_17, %c2, %c0_18] : memref<8x8x128xf32, #tpu.memory_space<vmem>>, vector<8x1x128xf32>
    %23 = vector.shape_cast %22 : vector<8x1x128xf32> to vector<8x128xf32>
    %24 = arith.addf %23, %21 : vector<8x128xf32>
    %25 = math.tanh %24 : vector<8x128xf32>
    %c0_19 = arith.constant 0 : index
    %c2_20 = arith.constant 2 : index
    %c0_21 = arith.constant 0 : index
    %26 = vector.load %arg4[%c0_19, %c2_20, %c0_21] : memref<8x8x128xf32, #tpu.memory_space<vmem>>, vector<8x1x128xf32>
    %27 = vector.shape_cast %26 : vector<8x1x128xf32> to vector<8x128xf32>
    %28 = vector.shape_cast %25 : vector<8x128xf32> to vector<8x1x128xf32>
    tpu.vector_store %arg4[%c0_19, %c2_20, %c0_21], %28 {strides = array<i32>} : memref<8x8x128xf32, #tpu.memory_space<vmem>>, vector<8x1x128xf32>,
    %cst_22 = arith.constant dense<0.000000e+00> : vector<8x128xf32>
    %29 = tpu.matmul %25, %3, %cst_22 {dimension_numbers = #tpu.dot_dimension_numbers<[1], [0], [0], [1], [0, 0, 1, 1], [], []>} : vector<8x128xf32>, vector<128x128xf32>, vector<8x128xf32> -> vector<8x128xf32>
    %c0_23 = arith.constant 0 : index
    %c3 = arith.constant 3 : index
    %c0_24 = arith.constant 0 : index
    %30 = vector.load %arg2[%c0_23, %c3, %c0_24] : memref<8x8x128xf32, #tpu.memory_space<vmem>>, vector<8x1x128xf32>
    %31 = vector.shape_cast %30 : vector<8x1x128xf32> to vector<8x128xf32>
    %32 = arith.addf %31, %29 : vector<8x128xf32>
    %33 = math.tanh %32 : vector<8x128xf32>
    %c0_25 = arith.constant 0 : index
    %c3_26 = arith.constant 3 : index
    %c0_27 = arith.constant 0 : index
    %34 = vector.load %arg4[%c0_25, %c3_26, %c0_27] : memref<8x8x128xf32, #tpu.memory_space<vmem>>, vector<8x1x128xf32>
    %35 = vector.shape_cast %34 : vector<8x1x128xf32> to vector<8x128xf32>
    %36 = vector.shape_cast %33 : vector<8x128xf32> to vector<8x1x128xf32>
    tpu.vector_store %arg4[%c0_25, %c3_26, %c0_27], %36 {strides = array<i32>} : memref<8x8x128xf32, #tpu.memory_space<vmem>>, vector<8x1x128xf32>,
    %cst_28 = arith.constant dense<0.000000e+00> : vector<8x128xf32>
    %37 = tpu.matmul %33, %3, %cst_28 {dimension_numbers = #tpu.dot_dimension_numbers<[1], [0], [0], [1], [0, 0, 1, 1], [], []>} : vector<8x128xf32>, vector<128x128xf32>, vector<8x128xf32> -> vector<8x128xf32>
    %c0_29 = arith.constant 0 : index
    %c4 = arith.constant 4 : index
    %c0_30 = arith.constant 0 : index
    %38 = vector.load %arg2[%c0_29, %c4, %c0_30] : memref<8x8x128xf32, #tpu.memory_space<vmem>>, vector<8x1x128xf32>
    %39 = vector.shape_cast %38 : vector<8x1x128xf32> to vector<8x128xf32>
    %40 = arith.addf %39, %37 : vector<8x128xf32>
    %41 = math.tanh %40 : vector<8x128xf32>
    %c0_31 = arith.constant 0 : index
    %c4_32 = arith.constant 4 : index
    %c0_33 = arith.constant 0 : index
    %42 = vector.load %arg4[%c0_31, %c4_32, %c0_33] : memref<8x8x128xf32, #tpu.memory_space<vmem>>, vector<8x1x128xf32>
    %43 = vector.shape_cast %42 : vector<8x1x128xf32> to vector<8x128xf32>
    %44 = vector.shape_cast %41 : vector<8x128xf32> to vector<8x1x128xf32>
    tpu.vector_store %arg4[%c0_31, %c4_32, %c0_33], %44 {strides = array<i32>} : memref<8x8x128xf32, #tpu.memory_space<vmem>>, vector<8x1x128xf32>,
    %cst_34 = arith.constant dense<0.000000e+00> : vector<8x128xf32>
    %45 = tpu.matmul %41, %3, %cst_34 {dimension_numbers = #tpu.dot_dimension_numbers<[1], [0], [0], [1], [0, 0, 1, 1], [], []>} : vector<8x128xf32>, vector<128x128xf32>, vector<8x128xf32> -> vector<8x128xf32>
    %c0_35 = arith.constant 0 : index
    %c5 = arith.constant 5 : index
    %c0_36 = arith.constant 0 : index
    %46 = vector.load %arg2[%c0_35, %c5, %c0_36] : memref<8x8x128xf32, #tpu.memory_space<vmem>>, vector<8x1x128xf32>
    %47 = vector.shape_cast %46 : vector<8x1x128xf32> to vector<8x128xf32>
    %48 = arith.addf %47, %45 : vector<8x128xf32>
    %49 = math.tanh %48 : vector<8x128xf32>
    %c0_37 = arith.constant 0 : index
    %c5_38 = arith.constant 5 : index
    %c0_39 = arith.constant 0 : index
    %50 = vector.load %arg4[%c0_37, %c5_38, %c0_39] : memref<8x8x128xf32, #tpu.memory_space<vmem>>, vector<8x1x128xf32>
    %51 = vector.shape_cast %50 : vector<8x1x128xf32> to vector<8x128xf32>
    %52 = vector.shape_cast %49 : vector<8x128xf32> to vector<8x1x128xf32>
    tpu.vector_store %arg4[%c0_37, %c5_38, %c0_39], %52 {strides = array<i32>} : memref<8x8x128xf32, #tpu.memory_space<vmem>>, vector<8x1x128xf32>,
    %cst_40 = arith.constant dense<0.000000e+00> : vector<8x128xf32>
    %53 = tpu.matmul %49, %3, %cst_40 {dimension_numbers = #tpu.dot_dimension_numbers<[1], [0], [0], [1], [0, 0, 1, 1], [], []>} : vector<8x128xf32>, vector<128x128xf32>, vector<8x128xf32> -> vector<8x128xf32>
    %c0_41 = arith.constant 0 : index
    %c6 = arith.constant 6 : index
    %c0_42 = arith.constant 0 : index
    %54 = vector.load %arg2[%c0_41, %c6, %c0_42] : memref<8x8x128xf32, #tpu.memory_space<vmem>>, vector<8x1x128xf32>
    %55 = vector.shape_cast %54 : vector<8x1x128xf32> to vector<8x128xf32>
    %56 = arith.addf %55, %53 : vector<8x128xf32>
    %57 = math.tanh %56 : vector<8x128xf32>
    %c0_43 = arith.constant 0 : index
    %c6_44 = arith.constant 6 : index
    %c0_45 = arith.constant 0 : index
    %58 = vector.load %arg4[%c0_43, %c6_44, %c0_45] : memref<8x8x128xf32, #tpu.memory_space<vmem>>, vector<8x1x128xf32>
    %59 = vector.shape_cast %58 : vector<8x1x128xf32> to vector<8x128xf32>
    %60 = vector.shape_cast %57 : vector<8x128xf32> to vector<8x1x128xf32>
    tpu.vector_store %arg4[%c0_43, %c6_44, %c0_45], %60 {strides = array<i32>} : memref<8x8x128xf32, #tpu.memory_space<vmem>>, vector<8x1x128xf32>,
    %cst_46 = arith.constant dense<0.000000e+00> : vector<8x128xf32>
    %61 = tpu.matmul %57, %3, %cst_46 {dimension_numbers = #tpu.dot_dimension_numbers<[1], [0], [0], [1], [0, 0, 1, 1], [], []>} : vector<8x128xf32>, vector<128x128xf32>, vector<8x128xf32> -> vector<8x128xf32>
    %c0_47 = arith.constant 0 : index
    %c7 = arith.constant 7 : index
    %c0_48 = arith.constant 0 : index
    %62 = vector.load %arg2[%c0_47, %c7, %c0_48] : memref<8x8x128xf32, #tpu.memory_space<vmem>>, vector<8x1x128xf32>
    %63 = vector.shape_cast %62 : vector<8x1x128xf32> to vector<8x128xf32>
    %64 = arith.addf %63, %61 : vector<8x128xf32>
    %65 = math.tanh %64 : vector<8x128xf32>
    %c0_49 = arith.constant 0 : index
    %c7_50 = arith.constant 7 : index
    %c0_51 = arith.constant 0 : index
    %66 = vector.load %arg4[%c0_49, %c7_50, %c0_51] : memref<8x8x128xf32, #tpu.memory_space<vmem>>, vector<8x1x128xf32>
    %67 = vector.shape_cast %66 : vector<8x1x128xf32> to vector<8x128xf32>
    %68 = vector.shape_cast %65 : vector<8x128xf32> to vector<8x1x128xf32>
    tpu.vector_store %arg4[%c0_49, %c7_50, %c0_51], %68 {strides = array<i32>} : memref<8x8x128xf32, #tpu.memory_space<vmem>>, vector<8x1x128xf32>,
    %c0_i32_52 = arith.constant 0 : i32
    %69 = arith.cmpi eq, %arg1, %c0_i32_52 : i32
    %70 = arith.extui %69 : i1 to i32
    %c0_i32_53 = arith.constant 0 : i32
    %71 = arith.cmpi ne, %70, %c0_i32_53 : i32
    scf.if %71 {
      %c0_56 = arith.constant 0 : index
      %c0_57 = arith.constant 0 : index
      %73 = vector.load %arg5[%c0_56, %c0_57] : memref<8x128xf32, #tpu.memory_space<vmem>>, vector<8x128xf32>
      tpu.vector_store %arg5[%c0_56, %c0_57], %65 {strides = array<i32>} : memref<8x128xf32, #tpu.memory_space<vmem>>, vector<8x128xf32>,
    } else {
    }
    %c0_54 = arith.constant 0 : index
    %c0_55 = arith.constant 0 : index
    %72 = vector.load %arg6[%c0_54, %c0_55] : memref<8x128xf32, #tpu.memory_space<vmem>>, vector<8x128xf32>
    tpu.vector_store %arg6[%c0_54, %c0_55], %65 {strides = array<i32>} : memref<8x128xf32, #tpu.memory_space<vmem>>, vector<8x128xf32>,
    return
  }
  func.func @transform_0(%arg0: i32, %arg1: i32) -> (i32, i32, i32) {
    %c0_i32 = arith.constant 0 : i32
    %c0_i32_0 = arith.constant 0 : i32
    return %arg0, %arg1, %c0_i32 : i32, i32, i32
  }
  func.func @transform_2(%arg0: i32, %arg1: i32) -> (i32, i32, i32) {
    %c0_i32 = arith.constant 0 : i32
    %c0_i32_0 = arith.constant 0 : i32
    return %arg0, %arg1, %c0_i32 : i32, i32, i32
  }
  func.func @transform_3(%arg0: i32, %arg1: i32) -> (i32, i32) {
    %c0_i32 = arith.constant 0 : i32
    %c0_i32_0 = arith.constant 0 : i32
    return %arg0, %c0_i32 : i32, i32
  }
}

</mosaic_0001>

<llo_original>
// kernel: encoder_forward.3
$region0: #{encoder_forward.3}
  #allocation0 [shape = 'u32[]', space=smem, size = 0x4, offset = 0x4, fixed_abs, tag = 'smem constant byte address 0x4 - core index']
  #allocation1 [shape = 'u32[72,128]{1,0:T(1,128)}', space=vmem, size = 0x9000, scoped, tag = 'internal scratch']
  %s0 = inlined_call_operand.vmem [shape: f32[8,128], index: 0, kind: input, shape index: {}]
  %s1 = inlined_call_operand.vmem [shape: f32[128,128], index: 1, kind: input, shape index: {}]
  %s2 = inlined_call_operand.vmem [shape: f32[1,128], index: 2, kind: input, shape index: {}]
  %s3 = inlined_call_operand.vmem [shape: f32[128,128], index: 3, kind: input, shape index: {}]
  %s4 = inlined_call_operand.vmem [shape: f32[1,128], index: 4, kind: input, shape index: {}]
  %s5 = inlined_call_operand.vmem [shape: f32[8,128], index: 5, kind: output, shape index: {}]
  %s6 = sld [smem:[#allocation0]]
  $region30: #{encoder_forward.3} parent=0
    _
  %s8 = ssub.s32 1, %s6
  %s9 = scalar_select 0, %s8, %s6
  // Predicated region
  $region2: #{encoder_forward.3} parent=0 // pred_check
    _
  $region3: #{encoder_forward.3} parent=0 // pred_check_branch
    %11 = sbr.rel (0) target = $region5
  $region4: #{encoder_forward.3} parent=0 // pred_region
    _
  $region5: #{encoder_forward.3} parent=0 // pred_fallthru
    _
  // Predicated region
  $region6: #{encoder_forward.3} parent=0 // pred_check
    _
  $region7: #{encoder_forward.3} parent=0 // pred_check_branch
    %13 = sbr.rel (0) target = $region9
  $region8: #{encoder_forward.3} parent=0 // pred_region
    _
  $region9: #{encoder_forward.3} parent=0 // pred_fallthru
    _
  // Predicated region
  $region10: #{encoder_forward.3} parent=0 // pred_check
    _
  $region11: #{encoder_forward.3} parent=0 // pred_check_branch
    %15 = sbr.rel (0) target = $region13
  $region12: #{encoder_forward.3} parent=0 // pred_region
    _
  $region13: #{encoder_forward.3} parent=0 // pred_fallthru
    _
  // Predicated region
  $region14: #{encoder_forward.3} parent=0 // pred_check
    _
  $region15: #{encoder_forward.3} parent=0 // pred_check_branch
    %17 = sbr.rel (0) target = $region17
  $region16: #{encoder_forward.3} parent=0 // pred_region
    _
  $region17: #{encoder_forward.3} parent=0 // pred_fallthru
    _
  // Predicated region
  $region18: #{encoder_forward.3} parent=0 // pred_check
    _
  $region19: #{encoder_forward.3} parent=0 // pred_check_branch
    %19 = sbr.rel (0) target = $region21
  $region20: #{encoder_forward.3} parent=0 // pred_region
    _
  $region21: #{encoder_forward.3} parent=0 // pred_fallthru
    _
  %v20 = vld [vmem:[%s0] sm:$0xff]
  %v21 = vld [vmem:[%s1] sm:$0xff]
  %v22 = vld [vmem:[%s1 + $0x8] sm:$0xff]
  %v23 = vld [vmem:[%s1 + $0x10] sm:$0xff]
  %v24 = vld [vmem:[%s1 + $0x18] sm:$0xff]
  %v25 = vld [vmem:[%s1 + $0x20] sm:$0xff]
  %v26 = vld [vmem:[%s1 + $0x28] sm:$0xff]
  %v27 = vld [vmem:[%s1 + $0x30] sm:$0xff]
  %v28 = vld [vmem:[%s1 + $0x38] sm:$0xff]
  %v29 = vld [vmem:[%s1 + $0x40] sm:$0xff]
  %v30 = vld [vmem:[%s1 + $0x48] sm:$0xff]
  %v31 = vld [vmem:[%s1 + $0x50] sm:$0xff]
  %v32 = vld [vmem:[%s1 + $0x58] sm:$0xff]
  %v33 = vld [vmem:[%s1 + $0x60] sm:$0xff]
  %v34 = vld [vmem:[%s1 + $0x68] sm:$0xff]
  %v35 = vld [vmem:[%s1 + $0x70] sm:$0xff]
  %v36 = vld [vmem:[%s1 + $0x78] sm:$0xff]
  %v37 = vld [vmem:[%s2] sm:$0x1]
  %v39 = vperm.slane %v37, 0
  %41 = vmatpush.msra.mxu0 %v36
  %42 = vmatpush.msra.mxu0 %v35
  %43 = vmatpush.msra.mxu0 %v34
  %44 = vmatpush.msra.mxu0 %v33
  %45 = vmatpush.msra.mxu0 %v32
  %46 = vmatpush.msra.mxu0 %v31
  %47 = vmatpush.msra.mxu0 %v30
  %48 = vmatpush.msra.mxu0 %v29
  %49 = vmatpush.msra.mxu0 %v28
  %50 = vmatpush.msra.mxu0 %v27
  %51 = vmatpush.msra.mxu0 %v26
  %52 = vmatpush.msra.mxu0 %v25
  %53 = vmatpush.msra.mxu0 %v24
  %54 = vmatpush.msra.mxu0 %v23
  %55 = vmatpush.msra.mxu0 %v22
  %56 = vmatpush.msra.mxu0 %v21
  %57 = vmatmul.f32.gmra.mxu0 %v20
  %v58 = vpop.f32.mrf.mxu0
  %v59 = vadd.f32 %v39, %v58
  %60 = vdwg.mxu0
  %v61 = vmax.f32 %v59, 0.0
  %v62 = vld [vmem:[%s3] sm:$0xff]
  %v63 = vld [vmem:[%s3 + $0x8] sm:$0xff]
  %v64 = vld [vmem:[%s3 + $0x10] sm:$0xff]
  %v65 = vld [vmem:[%s3 + $0x18] sm:$0xff]
  %v66 = vld [vmem:[%s3 + $0x20] sm:$0xff]
  %v67 = vld [vmem:[%s3 + $0x28] sm:$0xff]
  %v68 = vld [vmem:[%s3 + $0x30] sm:$0xff]
  %v69 = vld [vmem:[%s3 + $0x38] sm:$0xff]
  %v70 = vld [vmem:[%s3 + $0x40] sm:$0xff]
  %v71 = vld [vmem:[%s3 + $0x48] sm:$0xff]
  %v72 = vld [vmem:[%s3 + $0x50] sm:$0xff]
  %v73 = vld [vmem:[%s3 + $0x58] sm:$0xff]
  %v74 = vld [vmem:[%s3 + $0x60] sm:$0xff]
  %v75 = vld [vmem:[%s3 + $0x68] sm:$0xff]
  %v76 = vld [vmem:[%s3 + $0x70] sm:$0xff]
  %v77 = vld [vmem:[%s3 + $0x78] sm:$0xff]
  %v78 = vld [vmem:[%s4] sm:$0x1]
  %v80 = vperm.slane %v78, 0
  %82 = vmatpush.msra.mxu0 %v77
  %83 = vmatpush.msra.mxu0 %v76
  %84 = vmatpush.msra.mxu0 %v75
  %85 = vmatpush.msra.mxu0 %v74
  %86 = vmatpush.msra.mxu0 %v73
  %87 = vmatpush.msra.mxu0 %v72
  %88 = vmatpush.msra.mxu0 %v71
  %89 = vmatpush.msra.mxu0 %v70
  %90 = vmatpush.msra.mxu0 %v69
  %91 = vmatpush.msra.mxu0 %v68
  %92 = vmatpush.msra.mxu0 %v67
  %93 = vmatpush.msra.mxu0 %v66
  %94 = vmatpush.msra.mxu0 %v65
  %95 = vmatpush.msra.mxu0 %v64
  %96 = vmatpush.msra.mxu0 %v63
  %97 = vmatpush.msra.mxu0 %v62
  %98 = vmatmul.f32.gmra.mxu0 %v61
  %v99 = vpop.f32.mrf.mxu0
  %v100 = vadd.f32 %v80, %v99
  %101 = vdwg.mxu0
  %v102 = vtanh.pop %v100
  %103 = vst [vmem:[%s5] sm:$0xff] %v102
  // Predicated region
  $region22: #{encoder_forward.3} parent=0 // pred_check
    _
  $region23: #{encoder_forward.3} parent=0 // pred_check_branch
    %105 = sbr.rel (0) target = $region25
  $region24: #{encoder_forward.3} parent=0 // pred_region
    _
  $region25: #{encoder_forward.3} parent=0 // pred_fallthru
    _
  // Predicated region
  $region26: #{encoder_forward.3} parent=0 // pred_check
    _
  $region27: #{encoder_forward.3} parent=0 // pred_check_branch
    %107 = sbr.rel (0) target = $region29
  $region28: #{encoder_forward.3} parent=0 // pred_region
    _
  $region29: #{encoder_forward.3} parent=0 // pred_fallthru
    _

// kernel: encoder_forward.2
$region0: #{encoder_forward.2}
  #allocation0 [shape = 'u32[]', space=smem, size = 0x4, offset = 0x4, fixed_abs, tag = 'smem constant byte address 0x4 - core index']
  #allocation1 [shape = 'u32[72,128]{1,0:T(1,128)}', space=vmem, size = 0x9000, scoped, tag = 'internal scratch']
  #allocation2 [shape = 'f32[8,128]{1,0:T(8,128)}', space=vmem, size = 0x1000, scoped, tag = 'scratch operand']
  #allocation3 [shape = 'f32[128,128]{1,0:T(8,128)}', space=vmem, size = 0x10000, scoped, tag = 'scratch operand']
  #allocation4 [shape = 's32[1]{0}', space=sflag, size = 0x4, scoped, tag = 'scratch operand']
  #allocation5 [shape = 's32[]', space=sflag, size = 0x4, offset = 0, fixed_abs, tag = 'sflag constant byte address 0x0 - dummy sync flag']
  %s0 = inlined_call_operand.vmem [shape: f32[8,8,128], index: 0, kind: input, shape index: {}]
  %s1 = inlined_call_operand.vmem [shape: f32[128,128], index: 1, kind: input, shape index: {}]
  %s2 = inlined_call_operand.vmem [shape: f32[8,8,128], index: 2, kind: output, shape index: {0}]
  %s3 = inlined_call_operand.vmem [shape: f32[8,128], index: 3, kind: output, shape index: {1}]
  %4 = xla_tuple %s2, %s3
  %s5 = sld [smem:[#allocation0]]
  $region49: #{encoder_forward.2} parent=0
    _
  %s7 = ssub.s32 1, %s5
  %s8 = scalar_select 0, %s7, %s5
  // Predicated region
  $region2: #{encoder_forward.2} parent=0 // pred_check
    _
  $region3: #{encoder_forward.2} parent=0 // pred_check_branch
    %10 = sbr.rel (0) target = $region5
  $region4: #{encoder_forward.2} parent=0 // pred_region
    _
  $region5: #{encoder_forward.2} parent=0 // pred_fallthru
    _
  %p11 = scmp.eq.s32.totalorder 0, 0
  // Predicated region
  $region6: #{encoder_forward.2} parent=0 // pred_check
    %p12 = pneg %p11
  $region7: #{encoder_forward.2} parent=0 // pred_check_branch
    %14 = sbr.rel (%p12) target = $region9
  $region8: #{encoder_forward.2} parent=0 // pred_region
    %15 = vst [vmem:[#allocation2] sm:$0xff] 0.0
    // Predicated region
    $region10: #{encoder_forward.2} parent=8 // pred_check
      _
    $region11: #{encoder_forward.2} parent=8 // pred_check_branch
      %17 = sbr.rel (0) target = $region13
    $region12: #{encoder_forward.2} parent=8 // pred_region
      loop: start=0, step=1, limit=1
      $region14: #{encoder_forward.2} parent=12 // loop_pre_header
        _
      $region15: #{encoder_forward.2} parent=12 // loop_header
        %s19 = sphi 0, %s23
        %p20 = scmp.ge.s32.totalorder %s19, 1
        %s24 = sphi %s1, %s1
        %s25 = sphi [#allocation3], [#allocation3]
      $region16: #{encoder_forward.2} parent=12 // loop_header_branch
        %22 = sbr.rel (%p20) target = $region20
      $region17: #{encoder_forward.2} parent=12 // loop_body
        %v26 = vld [vmem:[%s24] sm:$0xff]
        %27 = vst [vmem:[%s25] sm:$0xff] %v26
        %v28 = vld [vmem:[%s24 + $0x8] sm:$0xff]
        %29 = vst [vmem:[%s25 + $0x8] sm:$0xff] %v28
        %v30 = vld [vmem:[%s24 + $0x10] sm:$0xff]
        %31 = vst [vmem:[%s25 + $0x10] sm:$0xff] %v30
        %v32 = vld [vmem:[%s24 + $0x18] sm:$0xff]
        %33 = vst [vmem:[%s25 + $0x18] sm:$0xff] %v32
        %v34 = vld [vmem:[%s24 + $0x20] sm:$0xff]
        %35 = vst [vmem:[%s25 + $0x20] sm:$0xff] %v34
        %v36 = vld [vmem:[%s24 + $0x28] sm:$0xff]
        %37 = vst [vmem:[%s25 + $0x28] sm:$0xff] %v36
        %v38 = vld [vmem:[%s24 + $0x30] sm:$0xff]
        %39 = vst [vmem:[%s25 + $0x30] sm:$0xff] %v38
        %v40 = vld [vmem:[%s24 + $0x38] sm:$0xff]
        %41 = vst [vmem:[%s25 + $0x38] sm:$0xff] %v40
        %v42 = vld [vmem:[%s24 + $0x40] sm:$0xff]
        %43 = vst [vmem:[%s25 + $0x40] sm:$0xff] %v42
        %v44 = vld [vmem:[%s24 + $0x48] sm:$0xff]
        %45 = vst [vmem:[%s25 + $0x48] sm:$0xff] %v44
        %v46 = vld [vmem:[%s24 + $0x50] sm:$0xff]
        %47 = vst [vmem:[%s25 + $0x50] sm:$0xff] %v46
        %v48 = vld [vmem:[%s24 + $0x58] sm:$0xff]
        %49 = vst [vmem:[%s25 + $0x58] sm:$0xff] %v48
        %v50 = vld [vmem:[%s24 + $0x60] sm:$0xff]
        %51 = vst [vmem:[%s25 + $0x60] sm:$0xff] %v50
        %v52 = vld [vmem:[%s24 + $0x68] sm:$0xff]
        %53 = vst [vmem:[%s25 + $0x68] sm:$0xff] %v52
        %v54 = vld [vmem:[%s24 + $0x70] sm:$0xff]
        %55 = vst [vmem:[%s25 + $0x70] sm:$0xff] %v54
        %v56 = vld [vmem:[%s24 + $0x78] sm:$0xff]
        %57 = vst [vmem:[%s25 + $0x78] sm:$0xff] %v56
      $region18: #{encoder_forward.2} parent=12 // loop_footer
        %s23 = sadd.s32 1, %s19
      $region19: #{encoder_forward.2} parent=12 // loop_footer_branch
        %18 = sbr.rel target = $region15
      $region20: #{encoder_forward.2} parent=12 // loop_exit
        _
    $region13: #{encoder_forward.2} parent=8 // pred_fallthru
      _
    // Predicated region
    $region21: #{encoder_forward.2} parent=8 // pred_check
      _
    $region22: #{encoder_forward.2} parent=8 // pred_check_branch
      %59 = sbr.rel target = $region24
    $region23: #{encoder_forward.2} parent=8 // pred_region
      _
    $region24: #{encoder_forward.2} parent=8 // pred_fallthru
      _
    // Predicated region
    $region25: #{encoder_forward.2} parent=8 // pred_check
      _
    $region26: #{encoder_forward.2} parent=8 // pred_check_branch
      %62 = sbr.rel (0) target = $region28
    $region27: #{encoder_forward.2} parent=8 // pred_region
      %63 = vsyncadd [#allocation4], 2048
    $region28: #{encoder_forward.2} parent=8 // pred_fallthru
      _
    %s64 = smul.u32 128, 1
    %s65 = sshll.u32 %s64, 4
    %66 = dma.done [#allocation4], %s65
  $region9: #{encoder_forward.2} parent=0 // pred_fallthru
    _
  %v67 = vld [vmem:[#allocation3] sm:$0xff]
  %v68 = vld [vmem:[#allocation3 + $0x8] sm:$0xff]
  %v69 = vld [vmem:[#allocation3 + $0x10] sm:$0xff]
  %v70 = vld [vmem:[#allocation3 + $0x18] sm:$0xff]
  %v71 = vld [vmem:[#allocation3 + $0x20] sm:$0xff]
  %v72 = vld [vmem:[#allocation3 + $0x28] sm:$0xff]
  %v73 = vld [vmem:[#allocation3 + $0x30] sm:$0xff]
  %v74 = vld [vmem:[#allocation3 + $0x38] sm:$0xff]
  %v75 = vld [vmem:[#allocation3 + $0x40] sm:$0xff]
  %v76 = vld [vmem:[#allocation3 + $0x48] sm:$0xff]
  %v77 = vld [vmem:[#allocation3 + $0x50] sm:$0xff]
  %v78 = vld [vmem:[#allocation3 + $0x58] sm:$0xff]
  %v79 = vld [vmem:[#allocation3 + $0x60] sm:$0xff]
  %v80 = vld [vmem:[#allocation3 + $0x68] sm:$0xff]
  %v81 = vld [vmem:[#allocation3 + $0x70] sm:$0xff]
  %v82 = vld [vmem:[#allocation3 + $0x78] sm:$0xff]
  %v83 = vld [vmem:[#allocation2] sm:$0xff]
  %84 = vmatpush.msra.mxu0 %v82
  %85 = vmatpush.msra.mxu0 %v81
  %86 = vmatpush.msra.mxu0 %v80
  %87 = vmatpush.msra.mxu0 %v79
  %88 = vmatpush.msra.mxu0 %v78
  %89 = vmatpush.msra.mxu0 %v77
  %90 = vmatpush.msra.mxu0 %v76
  %91 = vmatpush.msra.mxu0 %v75
  %92 = vmatpush.msra.mxu0 %v74
  %93 = vmatpush.msra.mxu0 %v73
  %94 = vmatpush.msra.mxu0 %v72
  %95 = vmatpush.msra.mxu0 %v71
  %96 = vmatpush.msra.mxu0 %v70
  %97 = vmatpush.msra.mxu0 %v69
  %98 = vmatpush.msra.mxu0 %v68
  %99 = vmatpush.msra.mxu0 %v67
  %100 = vmatmul.f32.gmra.mxu0 %v83
  %v101 = vpop.f32.mrf.mxu0
  %v102 = vadd.f32 0.0, %v101
  %103 = vdwg.mxu0
  %v104 = vld [vmem:[%s0] sm:$0x1]
  %v105 = vld [vmem:[%s0 + $0x8] sm:$0x1]
  %v106 = vld [vmem:[%s0 + $0x10] sm:$0x1]
  %v107 = vld [vmem:[%s0 + $0x18] sm:$0x1]
  %v108 = vld [vmem:[%s0 + $0x20] sm:$0x1]
  %v109 = vld [vmem:[%s0 + $0x28] sm:$0x1]
  %v110 = vld [vmem:[%s0 + $0x30] sm:$0x1]
  %v111 = vld [vmem:[%s0 + $0x38] sm:$0x1]
  %v113 = vrot.slane %v102, 1
  %v114 = vrot.slane %v102, 2
  %v115 = vrot.slane %v102, 3
  %v116 = vrot.slane %v102, 4
  %v117 = vrot.slane %v102, 5
  %v118 = vrot.slane %v102, 6
  %v119 = vrot.slane %v102, 7
  %v128 = vadd.f32 %v104, %v102
  %v129 = vadd.f32 %v105, %v113
  %v130 = vadd.f32 %v106, %v114
  %v131 = vadd.f32 %v107, %v115
  %v132 = vadd.f32 %v108, %v116
  %v133 = vadd.f32 %v109, %v117
  %v134 = vadd.f32 %v110, %v118
  %v135 = vadd.f32 %v111, %v119
  %v136 = vtanh.pop %v128
  %v137 = vtanh.pop %v129
  %v138 = vtanh.pop %v130
  %v139 = vtanh.pop %v131
  %v140 = vtanh.pop %v132
  %v141 = vtanh.pop %v133
  %v142 = vtanh.pop %v134
  %v143 = vtanh.pop %v135
  %144 = vst [vmem:[%s2] sm:$0x1] %v136
  %145 = vst [vmem:[%s2 + $0x8] sm:$0x1] %v137
  %146 = vst [vmem:[%s2 + $0x10] sm:$0x1] %v138
  %147 = vst [vmem:[%s2 + $0x18] sm:$0x1] %v139
  %148 = vst [vmem:[%s2 + $0x20] sm:$0x1] %v140
  %149 = vst [vmem:[%s2 + $0x28] sm:$0x1] %v141
  %150 = vst [vmem:[%s2 + $0x30] sm:$0x1] %v142
  %151 = vst [vmem:[%s2 + $0x38] sm:$0x1] %v143
  %v160 = vrot.slane %v137, 7
  %vm161 = vcmask 1041409
  %v162 = vsel %vm161, %v160, %v136
  %v163 = vrot.slane %v138, 6
  %vm164 = vcmask 1042434
  %v165 = vsel %vm164, %v163, %v162
  %v166 = vrot.slane %v139, 5
  %vm167 = vcmask 1043459
  %v168 = vsel %vm167, %v166, %v165
  %v169 = vrot.slane %v140, 4
  %vm170 = vcmask 1044484
  %v171 = vsel %vm170, %v169, %v168
  %v172 = vrot.slane %v141, 3
  %vm173 = vcmask 1045509
  %v174 = vsel %vm173, %v172, %v171
  %v175 = vrot.slane %v142, 2
  %vm176 = vcmask 1046534
  %v177 = vsel %vm176, %v175, %v174
  %v178 = vrot.slane %v143, 1
  %vm179 = vcmask 1047559
  %v180 = vsel %vm179, %v178, %v177
  %182 = vmatpush.msra.mxu0 %v82
  %183 = vmatpush.msra.mxu0 %v81
  %184 = vmatpush.msra.mxu0 %v80
  %185 = vmatpush.msra.mxu0 %v79
  %186 = vmatpush.msra.mxu0 %v78
  %187 = vmatpush.msra.mxu0 %v77
  %188 = vmatpush.msra.mxu0 %v76
  %189 = vmatpush.msra.mxu0 %v75
  %190 = vmatpush.msra.mxu0 %v74
  %191 = vmatpush.msra.mxu0 %v73
  %192 = vmatpush.msra.mxu0 %v72
  %193 = vmatpush.msra.mxu0 %v71
  %194 = vmatpush.msra.mxu0 %v70
  %195 = vmatpush.msra.mxu0 %v69
  %196 = vmatpush.msra.mxu0 %v68
  %197 = vmatpush.msra.mxu0 %v67
  %198 = vmatmul.f32.gmra.mxu0 %v180
  %v199 = vpop.f32.mrf.mxu0
  %v200 = vadd.f32 0.0, %v199
  %201 = vdwg.mxu0
  %v202 = vld [vmem:[%s0 + $0x1] sm:$0x1]
  %v203 = vld [vmem:[%s0 + $0x9] sm:$0x1]
  %v204 = vld [vmem:[%s0 + $0x11] sm:$0x1]
  %v205 = vld [vmem:[%s0 + $0x19] sm:$0x1]
  %v206 = vld [vmem:[%s0 + $0x21] sm:$0x1]
  %v207 = vld [vmem:[%s0 + $0x29] sm:$0x1]
  %v208 = vld [vmem:[%s0 + $0x31] sm:$0x1]
  %v209 = vld [vmem:[%s0 + $0x39] sm:$0x1]
  %v211 = vrot.slane %v200, 1
  %v212 = vrot.slane %v200, 2
  %v213 = vrot.slane %v200, 3
  %v214 = vrot.slane %v200, 4
  %v215 = vrot.slane %v200, 5
  %v216 = vrot.slane %v200, 6
  %v217 = vrot.slane %v200, 7
  %v226 = vadd.f32 %v202, %v200
  %v227 = vadd.f32 %v203, %v211
  %v228 = vadd.f32 %v204, %v212
  %v229 = vadd.f32 %v205, %v213
  %v230 = vadd.f32 %v206, %v214
  %v231 = vadd.f32 %v207, %v215
  %v232 = vadd.f32 %v208, %v216
  %v233 = vadd.f32 %v209, %v217
  %v234 = vtanh.pop %v226
  %v235 = vtanh.pop %v227
  %v236 = vtanh.pop %v228
  %v237 = vtanh.pop %v229
  %v238 = vtanh.pop %v230
  %v239 = vtanh.pop %v231
  %v240 = vtanh.pop %v232
  %v241 = vtanh.pop %v233
  %242 = vst [vmem:[%s2 + $0x1] sm:$0x1] %v234
  %243 = vst [vmem:[%s2 + $0x9] sm:$0x1] %v235
  %244 = vst [vmem:[%s2 + $0x11] sm:$0x1] %v236
  %245 = vst [vmem:[%s2 + $0x19] sm:$0x1] %v237
  %246 = vst [vmem:[%s2 + $0x21] sm:$0x1] %v238
  %247 = vst [vmem:[%s2 + $0x29] sm:$0x1] %v239
  %248 = vst [vmem:[%s2 + $0x31] sm:$0x1] %v240
  %249 = vst [vmem:[%s2 + $0x39] sm:$0x1] %v241
  %v258 = vrot.slane %v235, 7
  %v259 = vsel %vm161, %v258, %v234
  %v260 = vrot.slane %v236, 6
  %v261 = vsel %vm164, %v260, %v259
  %v262 = vrot.slane %v237, 5
  %v263 = vsel %vm167, %v262, %v261
  %v264 = vrot.slane %v238, 4
  %v265 = vsel %vm170, %v264, %v263
  %v266 = vrot.slane %v239, 3
  %v267 = vsel %vm173, %v266, %v265
  %v268 = vrot.slane %v240, 2
  %v269 = vsel %vm176, %v268, %v267
  %v270 = vrot.slane %v241, 1
  %v271 = vsel %vm179, %v270, %v269
  %273 = vmatpush.msra.mxu0 %v82
  %274 = vmatpush.msra.mxu0 %v81
  %275 = vmatpush.msra.mxu0 %v80
  %276 = vmatpush.msra.mxu0 %v79
  %277 = vmatpush.msra.mxu0 %v78
  %278 = vmatpush.msra.mxu0 %v77
  %279 = vmatpush.msra.mxu0 %v76
  %280 = vmatpush.msra.mxu0 %v75
  %281 = vmatpush.msra.mxu0 %v74
  %282 = vmatpush.msra.mxu0 %v73
  %283 = vmatpush.msra.mxu0 %v72
  %284 = vmatpush.msra.mxu0 %v71
  %285 = vmatpush.msra.mxu0 %v70
  %286 = vmatpush.msra.mxu0 %v69
  %287 = vmatpush.msra.mxu0 %v68
  %288 = vmatpush.msra.mxu0 %v67
  %289 = vmatmul.f32.gmra.mxu0 %v271
  %v290 = vpop.f32.mrf.mxu0
  %v291 = vadd.f32 0.0, %v290
  %292 = vdwg.mxu0
  %v293 = vld [vmem:[%s0 + $0x2] sm:$0x1]
  %v294 = vld [vmem:[%s0 + $0xa] sm:$0x1]
  %v295 = vld [vmem:[%s0 + $0x12] sm:$0x1]
  %v296 = vld [vmem:[%s0 + $0x1a] sm:$0x1]
  %v297 = vld [vmem:[%s0 + $0x22] sm:$0x1]
  %v298 = vld [vmem:[%s0 + $0x2a] sm:$0x1]
  %v299 = vld [vmem:[%s0 + $0x32] sm:$0x1]
  %v300 = vld [vmem:[%s0 + $0x3a] sm:$0x1]
  %v302 = vrot.slane %v291, 1
  %v303 = vrot.slane %v291, 2
  %v304 = vrot.slane %v291, 3
  %v305 = vrot.slane %v291, 4
  %v306 = vrot.slane %v291, 5
  %v307 = vrot.slane %v291, 6
  %v308 = vrot.slane %v291, 7
  %v317 = vadd.f32 %v293, %v291
  %v318 = vadd.f32 %v294, %v302
  %v319 = vadd.f32 %v295, %v303
  %v320 = vadd.f32 %v296, %v304
  %v321 = vadd.f32 %v297, %v305
  %v322 = vadd.f32 %v298, %v306
  %v323 = vadd.f32 %v299, %v307
  %v324 = vadd.f32 %v300, %v308
  %v325 = vtanh.pop %v317
  %v326 = vtanh.pop %v318
  %v327 = vtanh.pop %v319
  %v328 = vtanh.pop %v320
  %v329 = vtanh.pop %v321
  %v330 = vtanh.pop %v322
  %v331 = vtanh.pop %v323
  %v332 = vtanh.pop %v324
  %333 = vst [vmem:[%s2 + $0x2] sm:$0x1] %v325
  %334 = vst [vmem:[%s2 + $0xa] sm:$0x1] %v326
  %335 = vst [vmem:[%s2 + $0x12] sm:$0x1] %v327
  %336 = vst [vmem:[%s2 + $0x1a] sm:$0x1] %v328
  %337 = vst [vmem:[%s2 + $0x22] sm:$0x1] %v329
  %338 = vst [vmem:[%s2 + $0x2a] sm:$0x1] %v330
  %339 = vst [vmem:[%s2 + $0x32] sm:$0x1] %v331
  %340 = vst [vmem:[%s2 + $0x3a] sm:$0x1] %v332
  %v349 = vrot.slane %v326, 7
  %v350 = vsel %vm161, %v349, %v325
  %v351 = vrot.slane %v327, 6
  %v352 = vsel %vm164, %v351, %v350
  %v353 = vrot.slane %v328, 5
  %v354 = vsel %vm167, %v353, %v352
  %v355 = vrot.slane %v329, 4
  %v356 = vsel %vm170, %v355, %v354
  %v357 = vrot.slane %v330, 3
  %v358 = vsel %vm173, %v357, %v356
  %v359 = vrot.slane %v331, 2
  %v360 = vsel %vm176, %v359, %v358
  %v361 = vrot.slane %v332, 1
  %v362 = vsel %vm179, %v361, %v360
  %364 = vmatpush.msra.mxu0 %v82
  %365 = vmatpush.msra.mxu0 %v81
  %366 = vmatpush.msra.mxu0 %v80
  %367 = vmatpush.msra.mxu0 %v79
  %368 = vmatpush.msra.mxu0 %v78
  %369 = vmatpush.msra.mxu0 %v77
  %370 = vmatpush.msra.mxu0 %v76
  %371 = vmatpush.msra.mxu0 %v75
  %372 = vmatpush.msra.mxu0 %v74
  %373 = vmatpush.msra.mxu0 %v73
  %374 = vmatpush.msra.mxu0 %v72
  %375 = vmatpush.msra.mxu0 %v71
  %376 = vmatpush.msra.mxu0 %v70
  %377 = vmatpush.msra.mxu0 %v69
  %378 = vmatpush.msra.mxu0 %v68
  %379 = vmatpush.msra.mxu0 %v67
  %380 = vmatmul.f32.gmra.mxu0 %v362
  %v381 = vpop.f32.mrf.mxu0
  %v382 = vadd.f32 0.0, %v381
  %383 = vdwg.mxu0
  %v384 = vld [vmem:[%s0 + $0x3] sm:$0x1]
  %v385 = vld [vmem:[%s0 + $0xb] sm:$0x1]
  %v386 = vld [vmem:[%s0 + $0x13] sm:$0x1]
  %v387 = vld [vmem:[%s0 + $0x1b] sm:$0x1]
  %v388 = vld [vmem:[%s0 + $0x23] sm:$0x1]
  %v389 = vld [vmem:[%s0 + $0x2b] sm:$0x1]
  %v390 = vld [vmem:[%s0 + $0x33] sm:$0x1]
  %v391 = vld [vmem:[%s0 + $0x3b] sm:$0x1]
  %v393 = vrot.slane %v382, 1
  %v394 = vrot.slane %v382, 2
  %v395 = vrot.slane %v382, 3
  %v396 = vrot.slane %v382, 4
  %v397 = vrot.slane %v382, 5
  %v398 = vrot.slane %v382, 6
  %v399 = vrot.slane %v382, 7
  %v408 = vadd.f32 %v384, %v382
  %v409 = vadd.f32 %v385, %v393
  %v410 = vadd.f32 %v386, %v394
  %v411 = vadd.f32 %v387, %v395
  %v412 = vadd.f32 %v388, %v396
  %v413 = vadd.f32 %v389, %v397
  %v414 = vadd.f32 %v390, %v398
  %v415 = vadd.f32 %v391, %v399
  %v416 = vtanh.pop %v408
  %v417 = vtanh.pop %v409
  %v418 = vtanh.pop %v410
  %v419 = vtanh.pop %v411
  %v420 = vtanh.pop %v412
  %v421 = vtanh.pop %v413
  %v422 = vtanh.pop %v414
  %v423 = vtanh.pop %v415
  %424 = vst [vmem:[%s2 + $0x3] sm:$0x1] %v416
  %425 = vst [vmem:[%s2 + $0xb] sm:$0x1] %v417
  %426 = vst [vmem:[%s2 + $0x13] sm:$0x1] %v418
  %427 = vst [vmem:[%s2 + $0x1b] sm:$0x1] %v419
  %428 = vst [vmem:[%s2 + $0x23] sm:$0x1] %v420
  %429 = vst [vmem:[%s2 + $0x2b] sm:$0x1] %v421
  %430 = vst [vmem:[%s2 + $0x33] sm:$0x1] %v422
  %431 = vst [vmem:[%s2 + $0x3b] sm:$0x1] %v423
  %v440 = vrot.slane %v417, 7
  %v441 = vsel %vm161, %v440, %v416
  %v442 = vrot.slane %v418, 6
  %v443 = vsel %vm164, %v442, %v441
  %v444 = vrot.slane %v419, 5
  %v445 = vsel %vm167, %v444, %v443
  %v446 = vrot.slane %v420, 4
  %v447 = vsel %vm170, %v446, %v445
  %v448 = vrot.slane %v421, 3
  %v449 = vsel %vm173, %v448, %v447
  %v450 = vrot.slane %v422, 2
  %v451 = vsel %vm176, %v450, %v449
  %v452 = vrot.slane %v423, 1
  %v453 = vsel %vm179, %v452, %v451
  %455 = vmatpush.msra.mxu0 %v82
  %456 = vmatpush.msra.mxu0 %v81
  %457 = vmatpush.msra.mxu0 %v80
  %458 = vmatpush.msra.mxu0 %v79
  %459 = vmatpush.msra.mxu0 %v78
  %460 = vmatpush.msra.mxu0 %v77
  %461 = vmatpush.msra.mxu0 %v76
  %462 = vmatpush.msra.mxu0 %v75
  %463 = vmatpush.msra.mxu0 %v74
  %464 = vmatpush.msra.mxu0 %v73
  %465 = vmatpush.msra.mxu0 %v72
  %466 = vmatpush.msra.mxu0 %v71
  %467 = vmatpush.msra.mxu0 %v70
  %468 = vmatpush.msra.mxu0 %v69
  %469 = vmatpush.msra.mxu0 %v68
  %470 = vmatpush.msra.mxu0 %v67
  %471 = vmatmul.f32.gmra.mxu0 %v453
  %v472 = vpop.f32.mrf.mxu0
  %v473 = vadd.f32 0.0, %v472
  %474 = vdwg.mxu0
  %v475 = vld [vmem:[%s0 + $0x4] sm:$0x1]
  %v476 = vld [vmem:[%s0 + $0xc] sm:$0x1]
  %v477 = vld [vmem:[%s0 + $0x14] sm:$0x1]
  %v478 = vld [vmem:[%s0 + $0x1c] sm:$0x1]
  %v479 = vld [vmem:[%s0 + $0x24] sm:$0x1]
  %v480 = vld [vmem:[%s0 + $0x2c] sm:$0x1]
  %v481 = vld [vmem:[%s0 + $0x34] sm:$0x1]
  %v482 = vld [vmem:[%s0 + $0x3c] sm:$0x1]
  %v484 = vrot.slane %v473, 1
  %v485 = vrot.slane %v473, 2
  %v486 = vrot.slane %v473, 3
  %v487 = vrot.slane %v473, 4
  %v488 = vrot.slane %v473, 5
  %v489 = vrot.slane %v473, 6
  %v490 = vrot.slane %v473, 7
  %v499 = vadd.f32 %v475, %v473
  %v500 = vadd.f32 %v476, %v484
  %v501 = vadd.f32 %v477, %v485
  %v502 = vadd.f32 %v478, %v486
  %v503 = vadd.f32 %v479, %v487
  %v504 = vadd.f32 %v480, %v488
  %v505 = vadd.f32 %v481, %v489
  %v506 = vadd.f32 %v482, %v490
  %v507 = vtanh.pop %v499
  %v508 = vtanh.pop %v500
  %v509 = vtanh.pop %v501
  %v510 = vtanh.pop %v502
  %v511 = vtanh.pop %v503
  %v512 = vtanh.pop %v504
  %v513 = vtanh.pop %v505
  %v514 = vtanh.pop %v506
  %515 = vst [vmem:[%s2 + $0x4] sm:$0x1] %v507
  %516 = vst [vmem:[%s2 + $0xc] sm:$0x1] %v508
  %517 = vst [vmem:[%s2 + $0x14] sm:$0x1] %v509
  %518 = vst [vmem:[%s2 + $0x1c] sm:$0x1] %v510
  %519 = vst [vmem:[%s2 + $0x24] sm:$0x1] %v511
  %520 = vst [vmem:[%s2 + $0x2c] sm:$0x1] %v512
  %521 = vst [vmem:[%s2 + $0x34] sm:$0x1] %v513
  %522 = vst [vmem:[%s2 + $0x3c] sm:$0x1] %v514
  %v531 = vrot.slane %v508, 7
  %v532 = vsel %vm161, %v531, %v507
  %v533 = vrot.slane %v509, 6
  %v534 = vsel %vm164, %v533, %v532
  %v535 = vrot.slane %v510, 5
  %v536 = vsel %vm167, %v535, %v534
  %v537 = vrot.slane %v511, 4
  %v538 = vsel %vm170, %v537, %v536
  %v539 = vrot.slane %v512, 3
  %v540 = vsel %vm173, %v539, %v538
  %v541 = vrot.slane %v513, 2
  %v542 = vsel %vm176, %v541, %v540
  %v543 = vrot.slane %v514, 1
  %v544 = vsel %vm179, %v543, %v542
  %546 = vmatpush.msra.mxu0 %v82
  %547 = vmatpush.msra.mxu0 %v81
  %548 = vmatpush.msra.mxu0 %v80
  %549 = vmatpush.msra.mxu0 %v79
  %550 = vmatpush.msra.mxu0 %v78
  %551 = vmatpush.msra.mxu0 %v77
  %552 = vmatpush.msra.mxu0 %v76
  %553 = vmatpush.msra.mxu0 %v75
  %554 = vmatpush.msra.mxu0 %v74
  %555 = vmatpush.msra.mxu0 %v73
  %556 = vmatpush.msra.mxu0 %v72
  %557 = vmatpush.msra.mxu0 %v71
  %558 = vmatpush.msra.mxu0 %v70
  %559 = vmatpush.msra.mxu0 %v69
  %560 = vmatpush.msra.mxu0 %v68
  %561 = vmatpush.msra.mxu0 %v67
  %562 = vmatmul.f32.gmra.mxu0 %v544
  %v563 = vpop.f32.mrf.mxu0
  %v564 = vadd.f32 0.0, %v563
  %565 = vdwg.mxu0
  %v566 = vld [vmem:[%s0 + $0x5] sm:$0x1]
  %v567 = vld [vmem:[%s0 + $0xd] sm:$0x1]
  %v568 = vld [vmem:[%s0 + $0x15] sm:$0x1]
  %v569 = vld [vmem:[%s0 + $0x1d] sm:$0x1]
  %v570 = vld [vmem:[%s0 + $0x25] sm:$0x1]
  %v571 = vld [vmem:[%s0 + $0x2d] sm:$0x1]
  %v572 = vld [vmem:[%s0 + $0x35] sm:$0x1]
  %v573 = vld [vmem:[%s0 + $0x3d] sm:$0x1]
  %v575 = vrot.slane %v564, 1
  %v576 = vrot.slane %v564, 2
  %v577 = vrot.slane %v564, 3
  %v578 = vrot.slane %v564, 4
  %v579 = vrot.slane %v564, 5
  %v580 = vrot.slane %v564, 6
  %v581 = vrot.slane %v564, 7
  %v590 = vadd.f32 %v566, %v564
  %v591 = vadd.f32 %v567, %v575
  %v592 = vadd.f32 %v568, %v576
  %v593 = vadd.f32 %v569, %v577
  %v594 = vadd.f32 %v570, %v578
  %v595 = vadd.f32 %v571, %v579
  %v596 = vadd.f32 %v572, %v580
  %v597 = vadd.f32 %v573, %v581
  %v598 = vtanh.pop %v590
  %v599 = vtanh.pop %v591
  %v600 = vtanh.pop %v592
  %v601 = vtanh.pop %v593
  %v602 = vtanh.pop %v594
  %v603 = vtanh.pop %v595
  %v604 = vtanh.pop %v596
  %v605 = vtanh.pop %v597
  %606 = vst [vmem:[%s2 + $0x5] sm:$0x1] %v598
  %607 = vst [vmem:[%s2 + $0xd] sm:$0x1] %v599
  %608 = vst [vmem:[%s2 + $0x15] sm:$0x1] %v600
  %609 = vst [vmem:[%s2 + $0x1d] sm:$0x1] %v601
  %610 = vst [vmem:[%s2 + $0x25] sm:$0x1] %v602
  %611 = vst [vmem:[%s2 + $0x2d] sm:$0x1] %v603
  %612 = vst [vmem:[%s2 + $0x35] sm:$0x1] %v604
  %613 = vst [vmem:[%s2 + $0x3d] sm:$0x1] %v605
  %v622 = vrot.slane %v599, 7
  %v623 = vsel %vm161, %v622, %v598
  %v624 = vrot.slane %v600, 6
  %v625 = vsel %vm164, %v624, %v623
  %v626 = vrot.slane %v601, 5
  %v627 = vsel %vm167, %v626, %v625
  %v628 = vrot.slane %v602, 4
  %v629 = vsel %vm170, %v628, %v627
  %v630 = vrot.slane %v603, 3
  %v631 = vsel %vm173, %v630, %v629
  %v632 = vrot.slane %v604, 2
  %v633 = vsel %vm176, %v632, %v631
  %v634 = vrot.slane %v605, 1
  %v635 = vsel %vm179, %v634, %v633
  %637 = vmatpush.msra.mxu0 %v82
  %638 = vmatpush.msra.mxu0 %v81
  %639 = vmatpush.msra.mxu0 %v80
  %640 = vmatpush.msra.mxu0 %v79
  %641 = vmatpush.msra.mxu0 %v78
  %642 = vmatpush.msra.mxu0 %v77
  %643 = vmatpush.msra.mxu0 %v76
  %644 = vmatpush.msra.mxu0 %v75
  %645 = vmatpush.msra.mxu0 %v74
  %646 = vmatpush.msra.mxu0 %v73
  %647 = vmatpush.msra.mxu0 %v72
  %648 = vmatpush.msra.mxu0 %v71
  %649 = vmatpush.msra.mxu0 %v70
  %650 = vmatpush.msra.mxu0 %v69
  %651 = vmatpush.msra.mxu0 %v68
  %652 = vmatpush.msra.mxu0 %v67
  %653 = vmatmul.f32.gmra.mxu0 %v635
  %v654 = vpop.f32.mrf.mxu0
  %v655 = vadd.f32 0.0, %v654
  %656 = vdwg.mxu0
  %v657 = vld [vmem:[%s0 + $0x6] sm:$0x1]
  %v658 = vld [vmem:[%s0 + $0xe] sm:$0x1]
  %v659 = vld [vmem:[%s0 + $0x16] sm:$0x1]
  %v660 = vld [vmem:[%s0 + $0x1e] sm:$0x1]
  %v661 = vld [vmem:[%s0 + $0x26] sm:$0x1]
  %v662 = vld [vmem:[%s0 + $0x2e] sm:$0x1]
  %v663 = vld [vmem:[%s0 + $0x36] sm:$0x1]
  %v664 = vld [vmem:[%s0 + $0x3e] sm:$0x1]
  %v666 = vrot.slane %v655, 1
  %v667 = vrot.slane %v655, 2
  %v668 = vrot.slane %v655, 3
  %v669 = vrot.slane %v655, 4
  %v670 = vrot.slane %v655, 5
  %v671 = vrot.slane %v655, 6
  %v672 = vrot.slane %v655, 7
  %v681 = vadd.f32 %v657, %v655
  %v682 = vadd.f32 %v658, %v666
  %v683 = vadd.f32 %v659, %v667
  %v684 = vadd.f32 %v660, %v668
  %v685 = vadd.f32 %v661, %v669
  %v686 = vadd.f32 %v662, %v670
  %v687 = vadd.f32 %v663, %v671
  %v688 = vadd.f32 %v664, %v672
  %v689 = vtanh.pop %v681
  %v690 = vtanh.pop %v682
  %v691 = vtanh.pop %v683
  %v692 = vtanh.pop %v684
  %v693 = vtanh.pop %v685
  %v694 = vtanh.pop %v686
  %v695 = vtanh.pop %v687
  %v696 = vtanh.pop %v688
  %697 = vst [vmem:[%s2 + $0x6] sm:$0x1] %v689
  %698 = vst [vmem:[%s2 + $0xe] sm:$0x1] %v690
  %699 = vst [vmem:[%s2 + $0x16] sm:$0x1] %v691
  %700 = vst [vmem:[%s2 + $0x1e] sm:$0x1] %v692
  %701 = vst [vmem:[%s2 + $0x26] sm:$0x1] %v693
  %702 = vst [vmem:[%s2 + $0x2e] sm:$0x1] %v694
  %703 = vst [vmem:[%s2 + $0x36] sm:$0x1] %v695
  %704 = vst [vmem:[%s2 + $0x3e] sm:$0x1] %v696
  %v713 = vrot.slane %v690, 7
  %v714 = vsel %vm161, %v713, %v689
  %v715 = vrot.slane %v691, 6
  %v716 = vsel %vm164, %v715, %v714
  %v717 = vrot.slane %v692, 5
  %v718 = vsel %vm167, %v717, %v716
  %v719 = vrot.slane %v693, 4
  %v720 = vsel %vm170, %v719, %v718
  %v721 = vrot.slane %v694, 3
  %v722 = vsel %vm173, %v721, %v720
  %v723 = vrot.slane %v695, 2
  %v724 = vsel %vm176, %v723, %v722
  %v725 = vrot.slane %v696, 1
  %v726 = vsel %vm179, %v725, %v724
  %728 = vmatpush.msra.mxu0 %v82
  %729 = vmatpush.msra.mxu0 %v81
  %730 = vmatpush.msra.mxu0 %v80
  %731 = vmatpush.msra.mxu0 %v79
  %732 = vmatpush.msra.mxu0 %v78
  %733 = vmatpush.msra.mxu0 %v77
  %734 = vmatpush.msra.mxu0 %v76
  %735 = vmatpush.msra.mxu0 %v75
  %736 = vmatpush.msra.mxu0 %v74
  %737 = vmatpush.msra.mxu0 %v73
  %738 = vmatpush.msra.mxu0 %v72
  %739 = vmatpush.msra.mxu0 %v71
  %740 = vmatpush.msra.mxu0 %v70
  %741 = vmatpush.msra.mxu0 %v69
  %742 = vmatpush.msra.mxu0 %v68
  %743 = vmatpush.msra.mxu0 %v67
  %744 = vmatmul.f32.gmra.mxu0 %v726
  %v745 = vpop.f32.mrf.mxu0
  %v746 = vadd.f32 0.0, %v745
  %747 = vdwg.mxu0
  %v748 = vld [vmem:[%s0 + $0x7] sm:$0x1]
  %v749 = vld [vmem:[%s0 + $0xf] sm:$0x1]
  %v750 = vld [vmem:[%s0 + $0x17] sm:$0x1]
  %v751 = vld [vmem:[%s0 + $0x1f] sm:$0x1]
  %v752 = vld [vmem:[%s0 + $0x27] sm:$0x1]
  %v753 = vld [vmem:[%s0 + $0x2f] sm:$0x1]
  %v754 = vld [vmem:[%s0 + $0x37] sm:$0x1]
  %v755 = vld [vmem:[%s0 + $0x3f] sm:$0x1]
  %v757 = vrot.slane %v746, 1
  %v758 = vrot.slane %v746, 2
  %v759 = vrot.slane %v746, 3
  %v760 = vrot.slane %v746, 4
  %v761 = vrot.slane %v746, 5
  %v762 = vrot.slane %v746, 6
  %v763 = vrot.slane %v746, 7
  %v772 = vadd.f32 %v748, %v746
  %v773 = vadd.f32 %v749, %v757
  %v774 = vadd.f32 %v750, %v758
  %v775 = vadd.f32 %v751, %v759
  %v776 = vadd.f32 %v752, %v760
  %v777 = vadd.f32 %v753, %v761
  %v778 = vadd.f32 %v754, %v762
  %v779 = vadd.f32 %v755, %v763
  %v780 = vtanh.pop %v772
  %v781 = vtanh.pop %v773
  %v782 = vtanh.pop %v774
  %v783 = vtanh.pop %v775
  %v784 = vtanh.pop %v776
  %v785 = vtanh.pop %v777
  %v786 = vtanh.pop %v778
  %v787 = vtanh.pop %v779
  %788 = vst [vmem:[%s2 + $0x7] sm:$0x1] %v780
  %789 = vst [vmem:[%s2 + $0xf] sm:$0x1] %v781
  %790 = vst [vmem:[%s2 + $0x17] sm:$0x1] %v782
  %791 = vst [vmem:[%s2 + $0x1f] sm:$0x1] %v783
  %792 = vst [vmem:[%s2 + $0x27] sm:$0x1] %v784
  %793 = vst [vmem:[%s2 + $0x2f] sm:$0x1] %v785
  %794 = vst [vmem:[%s2 + $0x37] sm:$0x1] %v786
  %795 = vst [vmem:[%s2 + $0x3f] sm:$0x1] %v787
  // Predicated region
  $region29: #{encoder_forward.2} parent=0 // pred_check
    %p796 = pneg %p11
  $region30: #{encoder_forward.2} parent=0 // pred_check_branch
    %798 = sbr.rel (%p796) target = $region32
  $region31: #{encoder_forward.2} parent=0 // pred_region
    %v807 = vrot.slane %v781, 7
    %v808 = vsel %vm161, %v807, %v780
    %v809 = vrot.slane %v782, 6
    %v810 = vsel %vm164, %v809, %v808
    %v811 = vrot.slane %v783, 5
    %v812 = vsel %vm167, %v811, %v810
    %v813 = vrot.slane %v784, 4
    %v814 = vsel %vm170, %v813, %v812
    %v815 = vrot.slane %v785, 3
    %v816 = vsel %vm173, %v815, %v814
    %v817 = vrot.slane %v786, 2
    %v818 = vsel %vm176, %v817, %v816
    %v819 = vrot.slane %v787, 1
    %v820 = vsel %vm179, %v819, %v818
    %822 = vst [vmem:[%s3] sm:$0xff] %v820
  $region32: #{encoder_forward.2} parent=0 // pred_fallthru
    _
  %v831 = vrot.slane %v781, 7
  %v832 = vsel %vm161, %v831, %v780
  %v833 = vrot.slane %v782, 6
  %v834 = vsel %vm164, %v833, %v832
  %v835 = vrot.slane %v783, 5
  %v836 = vsel %vm167, %v835, %v834
  %v837 = vrot.slane %v784, 4
  %v838 = vsel %vm170, %v837, %v836
  %v839 = vrot.slane %v785, 3
  %v840 = vsel %vm173, %v839, %v838
  %v841 = vrot.slane %v786, 2
  %v842 = vsel %vm176, %v841, %v840
  %v843 = vrot.slane %v787, 1
  %v844 = vsel %vm179, %v843, %v842
  %846 = vst [vmem:[#allocation2] sm:$0xff] %v844
  // Predicated region
  $region33: #{encoder_forward.2} parent=0 // pred_check
    _
  $region34: #{encoder_forward.2} parent=0 // pred_check_branch
    %848 = sbr.rel (0) target = $region36
  $region35: #{encoder_forward.2} parent=0 // pred_region
    _
  $region36: #{encoder_forward.2} parent=0 // pred_fallthru
    _
  // Predicated region
  $region37: #{encoder_forward.2} parent=0 // pred_check
    _
  $region38: #{encoder_forward.2} parent=0 // pred_check_branch
    %850 = sbr.rel (0) target = $region40
  $region39: #{encoder_forward.2} parent=0 // pred_region
    _
  $region40: #{encoder_forward.2} parent=0 // pred_fallthru
    _
  // Predicated region
  $region41: #{encoder_forward.2} parent=0 // pred_check
    _
  $region42: #{encoder_forward.2} parent=0 // pred_check_branch
    %852 = sbr.rel (0) target = $region44
  $region43: #{encoder_forward.2} parent=0 // pred_region
    _
  $region44: #{encoder_forward.2} parent=0 // pred_fallthru
    _
  // Predicated region
  $region45: #{encoder_forward.2} parent=0 // pred_check
    _
  $region46: #{encoder_forward.2} parent=0 // pred_check_branch
    %854 = sbr.rel (0) target = $region48
  $region47: #{encoder_forward.2} parent=0 // pred_region
    _
  $region48: #{encoder_forward.2} parent=0 // pred_fallthru
    _
  %855 = vsyncmov [#allocation4]
  %s856 = vpop.sfrf %855
  %p857 = scmp.eq.s32.totalorder %s856, 0
  %p858 = pneg %p857
  %860 = shalt.err (%p858)

</llo_original>
